<compile_context>
chip_gen: v6e
topology: v6e:2x2x1
jax: 0.10.0
libtpu: 0.0.40
codegen_flags: <defaults>
</compile_context>

<pallas_src>
import functools

import jax
import jax.numpy as jnp
from jax import lax
from jax.experimental import pallas as pl
from jax.experimental.pallas import tpu as pltpu

_EPS = 1e-8  # matches torch.nn.functional.cosine_similarity default eps


def _round_up(x, m):
    return ((x + m - 1) // m) * m


def _contrastive_kernel(x_ref, psum_ref, cnt_out_ref, acc_ref, cnt_ref, *,
                        n_rows, tm, blocks_per_split):
    c = pl.program_id(0)   # core / split axis ("parallel")
    i = pl.program_id(1)   # row-tile reduction axis ("arbitrary")

    @pl.when(i == 0)
    def _init():
        acc_ref[...] = jnp.zeros_like(acc_ref)
        cnt_ref[...] = jnp.zeros_like(cnt_ref)

    x = x_ref[...].astype(jnp.float32)                          # [tm, D] (cast after load)
    d = x.shape[1]

    # Intended global rows of this tile. Ragged / redundant tiles are masked here
    # (the DMA block index is clamped in the index_map so it never faults).
    row0 = (c * blocks_per_split + i) * tm
    row_ids = row0 + lax.broadcasted_iota(jnp.int32, (tm, 1), 0)
    in_range = row_ids < n_rows                                 # [tm, 1] bool
    x = jnp.where(in_range, x, 0.0)   # also kills NaN/Inf garbage in OOB rows

    # beyond_0 selection: rows whose feature-sum is nonzero.
    row_sum = jnp.sum(x, axis=1, keepdims=True)                 # [tm, 1]
    sel = (row_sum != 0.0).astype(jnp.float32)                  # [tm, 1]

    # L2 normalization via rsqrt; clamping sumsq at eps^2 == clamping norm at eps.
    sumsq = jnp.sum(x * x, axis=1, keepdims=True)               # [tm, 1]
    inv_norm = lax.rsqrt(jnp.maximum(sumsq, jnp.float32(_EPS * _EPS)))
    xn = x * (inv_norm * sel)                                   # masked normalized rows

    # Running reductions (persist across the row-tile axis in scratch).
    # (tm, D) -> (tm//8, 8, D) is layout-preserving; summing axis 0 is pure VPU adds.
    acc_ref[...] += jnp.sum(xn.reshape(tm // 8, 8, d), axis=0)  # [8, D]
    cnt_ref[...] += jnp.sum(sel, keepdims=True)                 # [1, 1] == |S| so far

    @pl.when(i == pl.num_programs(1) - 1)
    def _finalize():
        psum_ref[...] = jnp.sum(acc_ref[...], axis=0, keepdims=True)  # [1, D]
        cnt_out_ref[...] = cnt_ref[...]                               # [1, 1]


def contrastive_loss_pallas(latent, cof1=0.01, row_tile=None, num_core_splits=2):
    """latent: [N, D] array (any float dtype). Returns the scalar loss (float32)."""
    latent = jnp.asarray(latent)
    n, d = latent.shape
    itemsize = jnp.dtype(latent.dtype).itemsize

    # Row tile sized by bytes: target ~2 MiB of f32 work per block (>=85% of HBM
    # roofline per measured tiled-add data) and comfortably inside v7x's VMEM.
    if row_tile is None:
        target_f32_bytes = 2 << 20
        tm = max(8, (target_f32_bytes // max(d * 4, 1)) // 8 * 8)
        tm = min(tm, 8192)
    else:
        tm = max(8, _round_up(int(row_tile), 8))
    tm = min(tm, _round_up(max(n, 1), 8))

    blocks_total = -(-n // tm)
    num_splits = max(1, min(int(num_core_splits), blocks_total))
    blocks_per_split = -(-blocks_total // num_splits)
    max_block = blocks_total - 1

    def in_index_map(c, i):
        # Clamp so redundant tail tiles never DMA past the array; their rows are
        # masked to zero in-kernel via the global-row-id check.
        return (jnp.minimum(c * blocks_per_split + i, max_block), 0)

    kernel = functools.partial(_contrastive_kernel, n_rows=n, tm=tm,
                               blocks_per_split=blocks_per_split)

    # VMEM budget: double-buffered input block + f32 temporaries headroom + slack.
    blk_in = tm * d * itemsize
    blk_f32 = tm * d * 4
    vmem_limit = max(8 << 20, min(32 << 20, 2 * blk_in + 6 * blk_f32 + (2 << 20)))

    cost = pl.CostEstimate(
        flops=5 * n * d,
        transcendentals=n,
        bytes_accessed=n * d * itemsize + num_splits * (d + 1) * 4,
    )

    partial_sums, counts = pl.pallas_call(
        kernel,
        out_shape=(
            jax.ShapeDtypeStruct((num_splits, d), jnp.float32),   # per-split sum of normalized rows
            jax.ShapeDtypeStruct((num_splits, 1), jnp.float32),   # per-split |beyond_0|
        ),
        grid_spec=pltpu.PrefetchScalarGridSpec(
            num_scalar_prefetch=0,
            grid=(num_splits, blocks_per_split),
            in_specs=[pl.BlockSpec((tm, d), in_index_map)],
            out_specs=[
                pl.BlockSpec((1, d), lambda c, i: (c, 0)),
                pl.BlockSpec((1, 1), lambda c, i: (c, 0)),
            ],
            scratch_shapes=[
                pltpu.VMEM((8, d), jnp.float32),   # vreg-native running row sum
                pltpu.VMEM((1, 1), jnp.float32),   # running |beyond_0| count
            ],
        ),
        compiler_params=pltpu.CompilerParams(
            # Leading axis shards the row stream across TensorCores on v7x;
            # trailing axis is the reduction into scratch.
            dimension_semantics=("parallel", "arbitrary"),
            vmem_limit_bytes=int(vmem_limit),
        ),
        cost_estimate=cost,
    )(latent)

    # Tiny JAX epilogue: partial sums must be ADDED before squaring.
    s = jnp.sum(partial_sums, axis=0)                  # [D]
    total = jnp.sum(s * s)                             # sum_{i,j in S} cos_sim
    cnt = jnp.sum(counts)                              # |S|
    return jnp.float32(cof1) * (total - cnt) / jnp.float32(2.0 * n)


def contrastive_loss_ref(latent, cof1=0.01):
    """Pure-JAX reference mirroring the PyTorch loop (Gram form)."""
    x = jnp.asarray(latent).astype(jnp.float32)
    mask = (jnp.sum(x, axis=1) != 0.0).astype(jnp.float32)       # [N]
    norm = jnp.maximum(jnp.sqrt(jnp.sum(x * x, axis=1)), _EPS)   # [N]
    xn = x / norm[:, None]
    gram = xn @ xn.T
    total = jnp.sum(gram * (mask[:, None] * mask[None, :]))
    count = jnp.sum(mask)
    return cof1 * (total - count) / (2.0 * x.shape[0])


if __name__ == "__main__":
    key = jax.random.PRNGKey(0)

    # Small demo shape consistent with the module: latent [N=8, D=32].
    N, D = 8, 32
    latent = jax.random.normal(key, (N, D), dtype=jnp.float32)
    latent = latent.at[3].set(0.0)  # exercise the beyond_0 masking path

    loss = contrastive_loss_pallas(latent, cof1=0.01)
    jax.block_until_ready(loss)
    ref = contrastive_loss_ref(latent, cof1=0.01)
    assert jnp.allclose(loss, ref, atol=1e-5, rtol=1e-5), (loss, ref)

    # Multi-tile + dual-split path with a ragged last tile (rows 21..23 masked)
    # and a fully redundant clamped tile on the second split.
    key2 = jax.random.PRNGKey(0)
    latent2 = jax.random.normal(key2, (21, 40), dtype=jnp.float32)
    latent2 = latent2.at[5].set(0.0)
    loss2 = contrastive_loss_pallas(latent2, cof1=0.01, row_tile=8)
    jax.block_until_ready(loss2)
    ref2 = contrastive_loss_ref(latent2, cof1=0.01)
    assert jnp.allclose(loss2, ref2, atol=1e-5, rtol=1e-5), (loss2, ref2)

    # Native-bf16 streaming path: no wrapper cast/copy, cast to f32 in-kernel.
    latent3 = latent2.astype(jnp.bfloat16)
    loss3 = contrastive_loss_pallas(latent3, cof1=0.01)
    jax.block_until_ready(loss3)
    ref3 = contrastive_loss_ref(latent3, cof1=0.01)
    assert jnp.allclose(loss3, ref3, atol=1e-4, rtol=1e-4), (loss3, ref3)

    print("KERNEL_OK")
</pallas_src>

<mosaic_0001>
module attributes {stable_mosaic.version = 11 : i64} {
  func.func @_contrastive_kernel(%arg0: i32, %arg1: i32, %arg2: memref<8x32xf32, #tpu.memory_space<vmem>>, %arg3: memref<1x32xf32, #tpu.memory_space<vmem>>, %arg4: memref<1x1xf32, #tpu.memory_space<vmem>>, %arg5: memref<8x32xf32, #tpu.memory_space<vmem>>, %arg6: memref<1x1xf32, #tpu.memory_space<vmem>>) attributes {dimension_semantics = [#tpu.dimension_semantics<parallel>, #tpu.dimension_semantics<arbitrary>], iteration_bounds = array<i64: 1, 1>, scalar_prefetch = 0 : i64, scratch_operands = 2 : i64, tpu.core_type = #tpu.core_type<tc>, window_params = [{transform_indices = @transform_0, window_bounds = array<i64: 8, 32>}, {transform_indices = @transform_1, window_bounds = array<i64: 1, 32>}, {transform_indices = @transform_2, window_bounds = array<i64: 1, 1>}]} {
    %c0_i32 = arith.constant 0 : i32
    %0 = arith.cmpi eq, %arg1, %c0_i32 : i32
    %1 = arith.extui %0 : i1 to i32
    %c0_i32_0 = arith.constant 0 : i32
    %2 = arith.cmpi ne, %1, %c0_i32_0 : i32
    scf.if %2 {
      %cst_19 = arith.constant 0.000000e+00 : f32
      %47 = vector.broadcast %cst_19 : f32 to vector<8x32xf32>
      %c0_20 = arith.constant 0 : index
      %c0_21 = arith.constant 0 : index
      %48 = vector.load %arg5[%c0_20, %c0_21] : memref<8x32xf32, #tpu.memory_space<vmem>>, vector<8x32xf32>
      tpu.vector_store %arg5[%c0_20, %c0_21], %47 {strides = array<i32>} : memref<8x32xf32, #tpu.memory_space<vmem>>, vector<8x32xf32>,
      %cst_22 = arith.constant 0.000000e+00 : f32
      %49 = vector.broadcast %cst_22 : f32 to vector<1x1xf32>
      %c0_23 = arith.constant 0 : index
      %c0_24 = arith.constant 0 : index
      %50 = vector.load %arg6[%c0_23, %c0_24] : memref<1x1xf32, #tpu.memory_space<vmem>>, vector<1x1xf32>
      tpu.vector_store %arg6[%c0_23, %c0_24], %49 {strides = array<i32>} : memref<1x1xf32, #tpu.memory_space<vmem>>, vector<1x1xf32>,
    } else {
    }
    %c0 = arith.constant 0 : index
    %c0_1 = arith.constant 0 : index
    %3 = vector.load %arg2[%c0, %c0_1] : memref<8x32xf32, #tpu.memory_space<vmem>>, vector<8x32xf32>
    %c1_i32 = arith.constant 1 : i32
    %4 = arith.muli %arg0, %c1_i32 : i32
    %5 = arith.addi %4, %arg1 : i32
    %c8_i32 = arith.constant 8 : i32
    %6 = arith.muli %5, %c8_i32 : i32
    %7 = tpu.iota {dimensions = array<i32: 0>} : vector<8x1xi32>
    %8 = vector.broadcast %6 : i32 to vector<8x1xi32>
    %9 = arith.addi %8, %7 : vector<8x1xi32>
    %c8_i32_2 = arith.constant 8 : i32
    %10 = vector.broadcast %c8_i32_2 : i32 to vector<8x1xi32>
    %11 = arith.cmpi slt, %9, %10 : vector<8x1xi32>
    %cst = arith.constant 0.000000e+00 : f32
    %12 = vector.shape_cast %11 : vector<8x1xi1> to vector<8x1xi1>
    %13 = vector.broadcast %12 : vector<8x1xi1> to vector<8x32xi1>
    %14 = vector.broadcast %cst : f32 to vector<8x32xf32>
    %15 = arith.select %13, %3, %14 : vector<8x32xi1>, vector<8x32xf32>
    %cst_3 = arith.constant dense<0.000000e+00> : vector<8xf32>
    %16 = vector.multi_reduction <add>, %15, %cst_3 [1] : vector<8x32xf32> to vector<8xf32>
    %17 = vector.shape_cast %16 : vector<8xf32> to vector<8x1xf32>
    %cst_4 = arith.constant 0.000000e+00 : f32
    %18 = vector.broadcast %cst_4 : f32 to vector<8x1xf32>
    %19 = arith.cmpf one, %17, %18 : vector<8x1xf32>
    %20 = arith.extui %19 : vector<8x1xi1> to vector<8x1xi32>
    %21 = arith.sitofp %20 : vector<8x1xi32> to vector<8x1xf32>
    %22 = arith.mulf %15, %15 : vector<8x32xf32>
    %cst_5 = arith.constant dense<0.000000e+00> : vector<8xf32>
    %23 = vector.multi_reduction <add>, %22, %cst_5 [1] : vector<8x32xf32> to vector<8xf32>
    %24 = vector.shape_cast %23 : vector<8xf32> to vector<8x1xf32>
    %cst_6 = arith.constant 1.000000e-16 : f32
    %25 = vector.broadcast %cst_6 : f32 to vector<8x1xf32>
    %26 = arith.maximumf %24, %25 : vector<8x1xf32>
    %27 = math.rsqrt %26 : vector<8x1xf32>
    %28 = arith.mulf %27, %21 : vector<8x1xf32>
    %29 = vector.broadcast %28 : vector<8x1xf32> to vector<8x32xf32>
    %30 = arith.mulf %15, %29 : vector<8x32xf32>
    %c0_7 = arith.constant 0 : index
    %c0_8 = arith.constant 0 : index
    %31 = vector.load %arg5[%c0_7, %c0_8] : memref<8x32xf32, #tpu.memory_space<vmem>>, vector<8x32xf32>
    %32 = vector.shape_cast %30 : vector<8x32xf32> to vector<1x8x32xf32>
    %cst_9 = arith.constant dense<0.000000e+00> : vector<8x32xf32>
    %33 = vector.multi_reduction <add>, %32, %cst_9 [0] : vector<1x8x32xf32> to vector<8x32xf32>
    %34 = arith.addf %31, %33 : vector<8x32xf32>
    %c0_10 = arith.constant 0 : index
    %c0_11 = arith.constant 0 : index
    %35 = vector.load %arg5[%c0_10, %c0_11] : memref<8x32xf32, #tpu.memory_space<vmem>>, vector<8x32xf32>
    tpu.vector_store %arg5[%c0_10, %c0_11], %34 {strides = array<i32>} : memref<8x32xf32, #tpu.memory_space<vmem>>, vector<8x32xf32>,
    %c0_12 = arith.constant 0 : index
    %c0_13 = arith.constant 0 : index
    %36 = vector.load %arg6[%c0_12, %c0_13] : memref<1x1xf32, #tpu.memory_space<vmem>>, vector<1x1xf32>
    %37 = vector.shape_cast %21 : vector<8x1xf32> to vector<1x8x1xf32>
    %cst_14 = arith.constant dense<0.000000e+00> : vector<1xf32>
    %38 = vector.multi_reduction <add>, %37, %cst_14 [1, 2] : vector<1x8x1xf32> to vector<1xf32>
    %39 = vector.shape_cast %38 : vector<1xf32> to vector<1x1x1xf32>
    %40 = vector.extract %39[0, 0, 0] : f32 from vector<1x1x1xf32>
    %41 = vector.broadcast %40 : f32 to vector<1x1xf32>
    %42 = arith.addf %36, %41 : vector<1x1xf32>
    %c0_15 = arith.constant 0 : index
    %c0_16 = arith.constant 0 : index
    %43 = vector.load %arg6[%c0_15, %c0_16] : memref<1x1xf32, #tpu.memory_space<vmem>>, vector<1x1xf32>
    tpu.vector_store %arg6[%c0_15, %c0_16], %42 {strides = array<i32>} : memref<1x1xf32, #tpu.memory_space<vmem>>, vector<1x1xf32>,
    %c0_i32_17 = arith.constant 0 : i32
    %44 = arith.cmpi eq, %arg1, %c0_i32_17 : i32
    %45 = arith.extui %44 : i1 to i32
    %c0_i32_18 = arith.constant 0 : i32
    %46 = arith.cmpi ne, %45, %c0_i32_18 : i32
    scf.if %46 {
      %c0_19 = arith.constant 0 : index
      %c0_20 = arith.constant 0 : index
      %47 = vector.load %arg5[%c0_19, %c0_20] : memref<8x32xf32, #tpu.memory_space<vmem>>, vector<8x32xf32>
      %cst_21 = arith.constant dense<0.000000e+00> : vector<32xf32>
      %48 = vector.multi_reduction <add>, %47, %cst_21 [0] : vector<8x32xf32> to vector<32xf32>
      %49 = vector.shape_cast %48 : vector<32xf32> to vector<1x32xf32>
      %c0_22 = arith.constant 0 : index
      %c0_23 = arith.constant 0 : index
      %50 = vector.load %arg3[%c0_22, %c0_23] : memref<1x32xf32, #tpu.memory_space<vmem>>, vector<1x32xf32>
      tpu.vector_store %arg3[%c0_22, %c0_23], %49 {strides = array<i32>} : memref<1x32xf32, #tpu.memory_space<vmem>>, vector<1x32xf32>,
      %c0_24 = arith.constant 0 : index
      %c0_25 = arith.constant 0 : index
      %51 = vector.load %arg6[%c0_24, %c0_25] : memref<1x1xf32, #tpu.memory_space<vmem>>, vector<1x1xf32>
      %c0_26 = arith.constant 0 : index
      %c0_27 = arith.constant 0 : index
      %52 = vector.load %arg4[%c0_26, %c0_27] : memref<1x1xf32, #tpu.memory_space<vmem>>, vector<1x1xf32>
      tpu.vector_store %arg4[%c0_26, %c0_27], %51 {strides = array<i32>} : memref<1x1xf32, #tpu.memory_space<vmem>>, vector<1x1xf32>,
    } else {
    }
    return
  }
  func.func @transform_0(%arg0: i32, %arg1: i32) -> (i32, i32) {
    %c1_i32 = arith.constant 1 : i32
    %0 = arith.muli %arg0, %c1_i32 : i32
    %1 = arith.addi %0, %arg1 : i32
    %c0_i32 = arith.constant 0 : i32
    %2 = arith.minsi %1, %c0_i32 : i32
    %c0_i32_0 = arith.constant 0 : i32
    %c0_i32_1 = arith.constant 0 : i32
    return %2, %c0_i32_0 : i32, i32
  }
  func.func @transform_1(%arg0: i32, %arg1: i32) -> (i32, i32) {
    %c0_i32 = arith.constant 0 : i32
    %c0_i32_0 = arith.constant 0 : i32
    return %arg0, %c0_i32 : i32, i32
  }
  func.func @transform_2(%arg0: i32, %arg1: i32) -> (i32, i32) {
    %c0_i32 = arith.constant 0 : i32
    %c0_i32_0 = arith.constant 0 : i32
    return %arg0, %c0_i32 : i32, i32
  }
}

</mosaic_0001>

<llo_original>
// kernel: tpu_custom_call.1
$region0: #{tpu_custom_call.1}
  #allocation0 [shape = 'u32[]', space=smem, size = 0x4, offset = 0x4, fixed_abs, tag = 'smem constant byte address 0x4 - core index']
  #allocation1 [shape = 'u32[144,128]{1,0:T(1,128)}', space=vmem, size = 0x12000, scoped, tag = 'internal scratch']
  #allocation2 [shape = 'f32[8,32]{1,0:T(8,128)}', space=vmem, size = 0x1000, scoped, tag = 'scratch operand']
  #allocation3 [shape = 'f32[1,1]{1,0:T(1,128)}', space=vmem, size = 0x200, scoped, tag = 'scratch operand']
  %s0 = inlined_call_operand.hbm [shape: f32[8,32], index: 0, kind: input, shape index: {}]
  %s1 = inlined_call_operand.hbm [shape: f32[1,32], index: 1, kind: output, shape index: {0}]
  %s2 = inlined_call_operand.hbm [shape: f32[1,1], index: 2, kind: output, shape index: {1}]
  %3 = xla_tuple %s1, %s2
  %s4 = sld [smem:[#allocation0]]
  $region34: #{tpu_custom_call.1} parent=0
    _
  %s6 = ssub.s32 1, %s4
  %s7 = scalar_select 0, %s6, %s4
  $region1: #{tpu_custom_call.1} parent=0
    #allocation4 [shape = 'u8[4096]{0}', space=vmem, size = 0x1000, scoped, tag = 'input window, operand 0, single buffered']
    #allocation5 [shape = 's32[1]{0}', space=sflag, size = 0x4, scoped, tag = 'scoped memory for tpu_custom_call.1']
    #allocation6 [shape = 's32[1]{0}', space=sflag, size = 0x4, scoped, tag = 'scoped memory for tpu_custom_call.1']
    #allocation7 [shape = 'u8[512]{0}', space=vmem, size = 0x400, scoped, tag = 'output window, operand 0, single buffered']
    #allocation8 [shape = 'u8[512]{0}', space=vmem, size = 0x400, scoped, tag = 'output window, operand 1, single buffered']
    #allocation9 [shape = 's32[1]{0}', space=sflag, size = 0x4, scoped, tag = 'scoped memory for tpu_custom_call.1']
    %8 = vsyncpa [#allocation5], 0
    %9 = vsyncpa [#allocation6], 0
    %10 = vsyncpa [#allocation9], 0
    // Predicated region
    $region2: #{tpu_custom_call.1} parent=1 // pred_check
      _
    $region3: #{tpu_custom_call.1} parent=1 // pred_check_branch
      %12 = sbr.rel (0) target = $region5
    $region4: #{tpu_custom_call.1} parent=1 // pred_region
      %s13 = sadd.s32 0, 0
      %p14 = scmp.lt.s32.totalorder %s13, 0
      %s15 = scalar_select %p14, %s13, 0
      %s17 = ssub.s32 128, 128
      %18 = vsyncadd [#allocation5], %s17
      %s19 = smul.addr %s15, 128
      %s20 = scalar_lea.hbm %s0, %s19
      %s22 = sshll.u32 [#allocation4], 4
      %s23 = int_to_ptr.vmem [resolvable:$true] %s22
      %25 = dma.hbm_to_vmem [thread:$0]  %s20, 128, %s23, [#allocation5]
    $region5: #{tpu_custom_call.1} parent=1 // pred_fallthru
      _
    // Predicated region
    $region6: #{tpu_custom_call.1} parent=1 // pred_check
      _
    $region7: #{tpu_custom_call.1} parent=1 // pred_check_branch
      %27 = sbr.rel (0) target = $region9
    $region8: #{tpu_custom_call.1} parent=1 // pred_region
      %28 = dma.done [#allocation5], 128
    $region9: #{tpu_custom_call.1} parent=1 // pred_fallthru
      _
    %s29 = sadd.s32 0, 0
    %p30 = scmp.lt.s32.totalorder %s29, 0
    %s31 = scalar_select %p30, %s29, 0
    %p32 = scmp.eq.s32.totalorder 0, 0
    // Predicated region
    $region10: #{tpu_custom_call.1} parent=1 // pred_check
      %p33 = pneg %p32
    $region11: #{tpu_custom_call.1} parent=1 // pred_check_branch
      %35 = sbr.rel (%p33) target = $region13
    $region12: #{tpu_custom_call.1} parent=1 // pred_region
      %vm36 = vcmask 261120
      %37 = vst.msk [vmem:[#allocation2] sm:$0xff] %vm36, 0.0
      %vm38 = vcmask 0
      %39 = vst.msk [vmem:[#allocation3] sm:$0x1] %vm38, 0.0
    $region13: #{tpu_custom_call.1} parent=1 // pred_fallthru
      _
    %v40 = vld [vmem:[#allocation4] sm:$0xff]
    %s41 = sadd.s32 0, 0
    %s42 = smul.u32 %s41, 8
    %v43 = vlaneseq
    %v44 = vshrl.u32 %v43, 7
    %v45 = vstv %s42
    %v46 = vadd.s32 %v45, %v44
    %vm47 = vcmp.lt.s32.totalorder %v46, 8
    %v48 = vsel %vm47, 1, 0
    %vm49 = vcmp.eq.s32.totalorder %v48, 1
    %v50 = vsel %vm49, %v40, 0.0
    %vm51 = vcmask 261120
    %v52 = vsel %vm51, %v50, 0.0
    %53 = vadd.xlane.f32.xlu0 %v52
    %v54 = vpop.xlane.xlu0 %53
    %vm55 = vcmp.ne.f32.partialorder %v54, 0.0
    %v56 = vsel %vm55, 1, 0
    %v57 = vcvt.s32.f32 %v56
    %v58 = vmul.f32 %v50, %v50
    %v59 = vsel %vm51, %v58, 0.0
    %60 = vadd.xlane.f32.xlu0 %v59
    %v61 = vpop.xlane.xlu0 %60
    %v62 = vmax.f32 %v61, 1e-16
    %v63 = vrsqrt.pop %v62
    %v64 = vmul.f32 %v63, %v57
    %v65 = vmul.f32 %v50, %v64
    %v66 = vld [vmem:[#allocation2] sm:$0xff]
    %v67 = vadd.f32 %v65, 0.0
    %v68 = vadd.f32 %v66, %v67
    %69 = vst.msk [vmem:[#allocation2] sm:$0xff] %vm51, %v68
    %v70 = vld [vmem:[#allocation3] sm:$0x1]
    %vm71 = vcmask 7168
    %v72 = vsel %vm71, %v57, 0.0
    %73 = vadd.xlane.f32.xlu0 %v72
    %v74 = vpop.xlane.xlu0 %73
    %v75 = vrot.slane %v74, 4
    %v76 = vadd.f32 %v74, %v75
    %v77 = vrot.slane %v76, 2
    %v78 = vadd.f32 %v76, %v77
    %v79 = vrot.slane %v78, 1
    %v80 = vadd.f32 %v78, %v79
    %s81 = vtos %v80
    %v82 = vstv %s81
    %v83 = vadd.f32 %v70, %v82
    %vm84 = vcmask 0
    %85 = vst.msk [vmem:[#allocation3] sm:$0x1] %vm84, %v83
    // Predicated region
    $region14: #{tpu_custom_call.1} parent=1 // pred_check
      %p86 = pneg %p32
    $region15: #{tpu_custom_call.1} parent=1 // pred_check_branch
      %88 = sbr.rel (%p86) target = $region17
    $region16: #{tpu_custom_call.1} parent=1 // pred_region
      %v89 = vld [vmem:[#allocation2] sm:$0xff]
      %v90 = vsel %vm51, %v89, 0.0
      %v91 = vrot.slane %v90, 4
      %v92 = vadd.f32 %v90, %v91
      %v93 = vrot.slane %v92, 2
      %v94 = vadd.f32 %v92, %v93
      %v95 = vrot.slane %v94, 1
      %v96 = vadd.f32 %v94, %v95
      %vm97 = vcmask 253952
      %98 = vst.msk [vmem:[#allocation7] sm:$0x1] %vm97, %v96
      %v99 = vld [vmem:[#allocation3] sm:$0x1]
      %100 = vst.msk [vmem:[#allocation8] sm:$0x1] %vm84, %v99
    $region17: #{tpu_custom_call.1} parent=1 // pred_fallthru
      _
    // Predicated region
    $region18: #{tpu_custom_call.1} parent=1 // pred_check
      _
    $region19: #{tpu_custom_call.1} parent=1 // pred_check_branch
      %102 = sbr.rel (0) target = $region21
    $region20: #{tpu_custom_call.1} parent=1 // pred_region
      %s104 = ssub.s32 16, 16
      %105 = vsyncadd [#allocation6], %s104
      %s107 = sshll.u32 [#allocation7], 4
      %s108 = int_to_ptr.vmem [resolvable:$true] %s107
      %110 = dma.vmem_to_hbm [thread:$0]  %s108, 16, %s1, [#allocation6]
    $region21: #{tpu_custom_call.1} parent=1 // pred_fallthru
      _
    // Predicated region
    $region22: #{tpu_custom_call.1} parent=1 // pred_check
      _
    $region23: #{tpu_custom_call.1} parent=1 // pred_check_branch
      %112 = sbr.rel (0) target = $region25
    $region24: #{tpu_custom_call.1} parent=1 // pred_region
      %s114 = ssub.s32 16, 16
      %115 = vsyncadd [#allocation9], %s114
      %s117 = sshll.u32 [#allocation8], 4
      %s118 = int_to_ptr.vmem [resolvable:$true] %s117
      %120 = dma.vmem_to_hbm [thread:$0]  %s118, 16, %s2, [#allocation9]
    $region25: #{tpu_custom_call.1} parent=1 // pred_fallthru
      _
    // Predicated region
    $region26: #{tpu_custom_call.1} parent=1 // pred_check
      _
    $region27: #{tpu_custom_call.1} parent=1 // pred_check_branch
      %122 = sbr.rel (0) target = $region29
    $region28: #{tpu_custom_call.1} parent=1 // pred_region
      %123 = dma.done [#allocation6], 16
    $region29: #{tpu_custom_call.1} parent=1 // pred_fallthru
      _
    // Predicated region
    $region30: #{tpu_custom_call.1} parent=1 // pred_check
      _
    $region31: #{tpu_custom_call.1} parent=1 // pred_check_branch
      %125 = sbr.rel (0) target = $region33
    $region32: #{tpu_custom_call.1} parent=1 // pred_region
      %126 = dma.done [#allocation9], 16
    $region33: #{tpu_custom_call.1} parent=1 // pred_fallthru
      _
    %127 = vsyncpa [#allocation5], 1
    %128 = vsyncpa [#allocation6], 1
    %129 = vsyncpa [#allocation9], 1

</llo_original>
